<compile_context>
chip_gen: v5e
topology: v5e:2x2
jax: 0.10.0
libtpu: 0.0.40
codegen_flags: <defaults>
</compile_context>

<pallas_src>
import jax
import jax.numpy as jnp
from jax.experimental import pallas as pl
from jax.experimental.pallas import tpu as pltpu


def _round_up(v, m):
    return (v + m - 1) // m * m


def _pooler_kernel(x_ref, w_ref, b_ref, out_ref):
    # x_ref: (TM, K)   w_ref: (K, TN)   b_ref: (1, TN)   out_ref: (TM, TN)
    h = jnp.dot(x_ref[...], w_ref[...], preferred_element_type=jnp.float32)
    h = h + b_ref[...].astype(jnp.float32)
    out_ref[...] = jnp.tanh(h).astype(out_ref.dtype)


def _pick_tn(n_pad):
    """Largest divisor of n_pad that is a multiple of 128, capped so that
    (a) TN <= 512 and (b) there are >= 2 N tiles whenever n_pad >= 256
    (lets v7x megacore split the weight stream across both TensorCores)."""
    cap = min(512, max(128, (n_pad // 2) // 128 * 128))
    tn = 128
    c = 128
    while c <= cap:
        if n_pad % c == 0:
            tn = c
        c += 128
    return tn


def albert_pooler(hidden_states, params):
    """hidden_states: [B, S, H].
    params['dense_w']: [H, H_out] (== torch dense.weight.T, stored in the
    dtype you want streamed, e.g. bf16), params['dense_b']: [H_out].
    Returns pooled output [B, H_out] in hidden_states.dtype."""
    B, S, H = hidden_states.shape
    w = params["dense_w"]
    b = params["dense_b"]
    K, N = w.shape
    assert K == H

    out_dtype = hidden_states.dtype

    # First-token extraction: cheap XLA slice (B*H bytes), kept outside.
    # TODO(synk): could be fused via a (TM, 1, H) BlockSpec on hidden_states;
    # the absolute win is tiny for this weight-bound op.
    x = hidden_states[:, 0, :]                             # (B, H)

    # ---- tile sizes (full-K blocks, lane-dense output) ----
    b_pad8 = _round_up(max(B, 1), 8)
    TM = b_pad8 if b_pad8 <= 256 else 128
    Mp = _round_up(B, TM)

    Np = _round_up(N, 128)
    TN = _pick_tn(Np)                                      # Np % TN == 0

    # ---- pad only when the shapes actually require it ----
    if Mp != B:
        x = jnp.zeros((Mp, H), dtype=x.dtype).at[:B, :].set(x)
    if Np != N:
        w = jnp.zeros((K, Np), dtype=w.dtype).at[:, :N].set(w)
        b2 = jnp.zeros((1, Np), dtype=b.dtype).at[0, :N].set(b)
    else:
        b2 = b.reshape(1, N)

    grid = (Np // TN, Mp // TM)                            # M = inner (fast) axis

    # ---- double-buffered VMEM footprint -> explicit scoped limit ----
    foot = 2 * (TM * K * x.dtype.itemsize
                + K * TN * w.dtype.itemsize
                + TN * b2.dtype.itemsize
                + TM * TN * jnp.dtype(out_dtype).itemsize)
    vmem_limit = min(max(int(foot * 1.5) + (2 << 20), 16 << 20), 64 << 20)

    cost = pl.CostEstimate(
        flops=2 * Mp * K * Np,
        transcendentals=Mp * Np,
        bytes_accessed=(Mp * K * x.dtype.itemsize
                        + K * Np * w.dtype.itemsize
                        + Np * b2.dtype.itemsize
                        + Mp * Np * jnp.dtype(out_dtype).itemsize),
    )

    out = pl.pallas_call(
        _pooler_kernel,
        out_shape=jax.ShapeDtypeStruct((Mp, Np), out_dtype),
        grid_spec=pl.GridSpec(
            grid=grid,
            in_specs=[
                pl.BlockSpec((TM, K), lambda j, i: (i, 0)),   # x streams on inner M
                pl.BlockSpec((K, TN), lambda j, i: (0, j)),   # W resident over inner M
                pl.BlockSpec((1, TN), lambda j, i: (0, j)),   # bias tile
            ],
            out_specs=pl.BlockSpec((TM, TN), lambda j, i: (i, j)),
        ),
        compiler_params=pltpu.CompilerParams(
            dimension_semantics=("parallel", "parallel"),
            vmem_limit_bytes=vmem_limit),
        cost_estimate=cost,
    )(x, w, b2)

    if Mp != B or Np != N:
        out = out[:B, :N]
    return out


def reference_pooler(hidden_states, params):
    """Pure-JAX reference (f32 math) for verification."""
    x = hidden_states[:, 0, :].astype(jnp.float32)
    w = params["dense_w"].astype(jnp.float32)
    b = params["dense_b"].astype(jnp.float32)
    return jnp.tanh(x @ w + b)


if __name__ == "__main__":
    # Small ALBERT-like config
    batch, seq, hidden_size = 2, 8, 32

    key = jax.random.PRNGKey(0)
    k_x, k_w, k_b = jax.random.split(key, 3)

    hidden_states = jax.random.normal(
        k_x, (batch, seq, hidden_size), dtype=jnp.float32)

    params = {
        # stored pre-transposed relative to torch nn.Linear.weight
        "dense_w": jax.random.normal(
            k_w, (hidden_size, hidden_size), dtype=jnp.float32) * 0.02,
        "dense_b": jax.random.normal(
            k_b, (hidden_size,), dtype=jnp.float32) * 0.02,
    }

    # f32 path (tight tolerance)
    out = jax.block_until_ready(albert_pooler(hidden_states, params))
    ref = reference_pooler(hidden_states, params)
    assert out.shape == (batch, hidden_size)
    assert jnp.allclose(out, ref, atol=1e-5, rtol=1e-5), \
        f"f32 max abs err = {jnp.max(jnp.abs(out - ref))}"

    # bf16 streaming path: params stored in bf16, f32 accumulate + epilogue
    hs_bf16 = hidden_states.astype(jnp.bfloat16)
    params_bf16 = {k: v.astype(jnp.bfloat16) for k, v in params.items()}
    out_bf16 = jax.block_until_ready(albert_pooler(hs_bf16, params_bf16))
    ref_bf16 = reference_pooler(hs_bf16, params_bf16)
    assert out_bf16.shape == (batch, hidden_size)
    assert jnp.allclose(out_bf16.astype(jnp.float32), ref_bf16,
                        atol=2e-2, rtol=2e-2), \
        f"bf16 max abs err = {jnp.max(jnp.abs(out_bf16.astype(jnp.float32) - ref_bf16))}"

    print("KERNEL_OK")
</pallas_src>

<mosaic_0001>
module attributes {stable_mosaic.version = 11 : i64} {
  func.func @_pooler_kernel(%arg0: i32, %arg1: i32, %arg2: memref<8x32xf32, #tpu.memory_space<vmem>>, %arg3: memref<32x128xf32, #tpu.memory_space<vmem>>, %arg4: memref<1x128xf32, #tpu.memory_space<vmem>>, %arg5: memref<8x128xf32, #tpu.memory_space<vmem>>) attributes {dimension_semantics = [#tpu.dimension_semantics<parallel>, #tpu.dimension_semantics<parallel>], iteration_bounds = array<i64: 1, 1>, scalar_prefetch = 0 : i64, scratch_operands = 0 : i64, tpu.core_type = #tpu.core_type<tc>, window_params = [{transform_indices = @transform_0, window_bounds = array<i64: 8, 32>}, {transform_indices = @transform_1, window_bounds = array<i64: 32, 128>}, {transform_indices = @transform_2, window_bounds = array<i64: 1, 128>}, {transform_indices = @transform_3, window_bounds = array<i64: 8, 128>}]} {
    %c0 = arith.constant 0 : index
    %c0_0 = arith.constant 0 : index
    %0 = vector.load %arg2[%c0, %c0_0] : memref<8x32xf32, #tpu.memory_space<vmem>>, vector<8x32xf32>
    %c0_1 = arith.constant 0 : index
    %c0_2 = arith.constant 0 : index
    %1 = vector.load %arg3[%c0_1, %c0_2] : memref<32x128xf32, #tpu.memory_space<vmem>>, vector<32x128xf32>
    %cst = arith.constant dense<0.000000e+00> : vector<8x128xf32>
    %2 = tpu.matmul %0, %1, %cst {dimension_numbers = #tpu.dot_dimension_numbers<[1], [0], [0], [1], [0, 0, 1, 1], [], []>} : vector<8x32xf32>, vector<32x128xf32>, vector<8x128xf32> -> vector<8x128xf32>
    %c0_3 = arith.constant 0 : index
    %c0_4 = arith.constant 0 : index
    %3 = vector.load %arg4[%c0_3, %c0_4] : memref<1x128xf32, #tpu.memory_space<vmem>>, vector<1x128xf32>
    %4 = vector.broadcast %3 : vector<1x128xf32> to vector<8x128xf32>
    %5 = arith.addf %2, %4 : vector<8x128xf32>
    %6 = math.tanh %5 : vector<8x128xf32>
    %c0_5 = arith.constant 0 : index
    %c0_6 = arith.constant 0 : index
    %7 = vector.load %arg5[%c0_5, %c0_6] : memref<8x128xf32, #tpu.memory_space<vmem>>, vector<8x128xf32>
    tpu.vector_store %arg5[%c0_5, %c0_6], %6 {strides = array<i32>} : memref<8x128xf32, #tpu.memory_space<vmem>>, vector<8x128xf32>,
    return
  }
  func.func @transform_0(%arg0: i32, %arg1: i32) -> (i32, i32) {
    %c0_i32 = arith.constant 0 : i32
    %c0_i32_0 = arith.constant 0 : i32
    return %arg1, %c0_i32 : i32, i32
  }
  func.func @transform_1(%arg0: i32, %arg1: i32) -> (i32, i32) {
    %c0_i32 = arith.constant 0 : i32
    %c0_i32_0 = arith.constant 0 : i32
    return %c0_i32, %arg0 : i32, i32
  }
  func.func @transform_2(%arg0: i32, %arg1: i32) -> (i32, i32) {
    %c0_i32 = arith.constant 0 : i32
    %c0_i32_0 = arith.constant 0 : i32
    return %c0_i32, %arg0 : i32, i32
  }
  func.func @transform_3(%arg0: i32, %arg1: i32) -> (i32, i32) {
    %c0_i32 = arith.constant 0 : i32
    return %arg1, %arg0 : i32, i32
  }
}

</mosaic_0001>

<llo_original>
// kernel: tpu_custom_call.1
$region0: #{tpu_custom_call.1}
  #allocation0 [shape = 'u32[]', space=smem, size = 0x4, offset = 0x4, fixed_abs, tag = 'smem constant byte address 0x4 - core index']
  #allocation1 [shape = 'u32[72,128]{1,0:T(1,128)}', space=vmem, size = 0x9000, scoped, tag = 'internal scratch']
  %s0 = inlined_call_operand.hbm [shape: f32[8,32], index: 0, kind: input, shape index: {}]
  %s1 = inlined_call_operand.hbm [shape: f32[32,128], index: 1, kind: input, shape index: {}]
  %s2 = inlined_call_operand.vmem [shape: f32[1,128], index: 2, kind: input, shape index: {}]
  %s3 = inlined_call_operand.hbm [shape: f32[8,128], index: 3, kind: output, shape index: {}]
  %s4 = sld [smem:[#allocation0]]
  $region30: #{tpu_custom_call.1} parent=0
    _
  %s6 = ssub.s32 1, %s4
  %s7 = scalar_select 0, %s6, %s4
  $region1: #{tpu_custom_call.1} parent=0
    #allocation2 [shape = 'u8[4096]{0}', space=vmem, size = 0x1000, scoped, tag = 'input window, operand 0, single buffered']
    #allocation3 [shape = 's32[1]{0}', space=sflag, size = 0x4, scoped, tag = 'scoped memory for tpu_custom_call.1']
    #allocation4 [shape = 's32[1]{0}', space=sflag, size = 0x4, scoped, tag = 'scoped memory for tpu_custom_call.1']
    #allocation5 [shape = 'u8[16384]{0}', space=vmem, size = 0x4000, scoped, tag = 'input window, operand 1, single buffered']
    #allocation6 [shape = 's32[1]{0}', space=sflag, size = 0x4, scoped, tag = 'scoped memory for tpu_custom_call.1']
    #allocation7 [shape = 'u8[4096]{0}', space=vmem, size = 0x1000, scoped, tag = 'output window, operand 0, single buffered']
    %8 = vsyncpa [#allocation3], 0
    %9 = vsyncpa [#allocation6], 0
    %10 = vsyncpa [#allocation4], 0
    // Predicated region
    $region2: #{tpu_custom_call.1} parent=1 // pred_check
      _
    $region3: #{tpu_custom_call.1} parent=1 // pred_check_branch
      %12 = sbr.rel (0) target = $region5
    $region4: #{tpu_custom_call.1} parent=1 // pred_region
      %14 = vsyncadd [#allocation3], 0
      %s16 = sshll.u32 %s0, 4
      %s17 = int_to_ptr.hbm [resolvable:$true] %s16
      %s18 = sshll.u32 [#allocation2], 4
      %s19 = int_to_ptr.vmem [resolvable:$true] %s18
      %21 = dma.hbm_to_vmem [thread:$0]  %s17, 128, %s19, [#allocation3]
    $region5: #{tpu_custom_call.1} parent=1 // pred_fallthru
      _
    // Predicated region
    $region6: #{tpu_custom_call.1} parent=1 // pred_check
      _
    $region7: #{tpu_custom_call.1} parent=1 // pred_check_branch
      %23 = sbr.rel (0) target = $region9
    $region8: #{tpu_custom_call.1} parent=1 // pred_region
      %25 = vsyncadd [#allocation6], 0
      %s26 = sshll.u32 %s1, 4
      %s27 = int_to_ptr.hbm [resolvable:$true] %s26
      %s28 = sshll.u32 [#allocation5], 4
      %s29 = int_to_ptr.vmem [resolvable:$true] %s28
      %34 = dma.hbm_to_vmem [thread:$0]  %s27, 512, %s29, [#allocation6], 128, 128, 8
    $region9: #{tpu_custom_call.1} parent=1 // pred_fallthru
      _
    // Predicated region
    $region10: #{tpu_custom_call.1} parent=1 // pred_check
      _
    $region11: #{tpu_custom_call.1} parent=1 // pred_check_branch
      %36 = sbr.rel (0) target = $region13
    $region12: #{tpu_custom_call.1} parent=1 // pred_region
      _
    $region13: #{tpu_custom_call.1} parent=1 // pred_fallthru
      _
    // Predicated region
    $region14: #{tpu_custom_call.1} parent=1 // pred_check
      _
    $region15: #{tpu_custom_call.1} parent=1 // pred_check_branch
      %38 = sbr.rel (0) target = $region17
    $region16: #{tpu_custom_call.1} parent=1 // pred_region
      %40 = dma.done [#allocation3], 128
    $region17: #{tpu_custom_call.1} parent=1 // pred_fallthru
      _
    // Predicated region
    $region18: #{tpu_custom_call.1} parent=1 // pred_check
      _
    $region19: #{tpu_custom_call.1} parent=1 // pred_check_branch
      %42 = sbr.rel (0) target = $region21
    $region20: #{tpu_custom_call.1} parent=1 // pred_region
      %44 = dma.done [#allocation6], 512
    $region21: #{tpu_custom_call.1} parent=1 // pred_fallthru
      _
    %v45 = vld [vmem:[#allocation2] sm:$0xff]
    %v46 = vld [vmem:[#allocation5] sm:$0xff]
    %v47 = vld [vmem:[#allocation5 + $0x8] sm:$0xff]
    %v48 = vld [vmem:[#allocation5 + $0x10] sm:$0xff]
    %v49 = vld [vmem:[#allocation5 + $0x18] sm:$0xff]
    %v50 = vld [vmem:[%s2] sm:$0x1]
    %v52 = vperm.slane %v50, 0
    %vm54 = vcmask 261120
    %v56 = vsel %vm54, %v45, 0
    %58 = vmatpush.msra.mxu0 0.0
    %59 = vmatpush.msra.mxu0 0.0
    %60 = vmatpush.msra.mxu0 0.0
    %61 = vmatpush.msra.mxu0 0.0
    %62 = vmatpush.msra.mxu0 0.0
    %63 = vmatpush.msra.mxu0 0.0
    %64 = vmatpush.msra.mxu0 0.0
    %65 = vmatpush.msra.mxu0 0.0
    %66 = vmatpush.msra.mxu0 0.0
    %67 = vmatpush.msra.mxu0 0.0
    %68 = vmatpush.msra.mxu0 0.0
    %69 = vmatpush.msra.mxu0 0.0
    %70 = vmatpush.msra.mxu0 %v49
    %71 = vmatpush.msra.mxu0 %v48
    %72 = vmatpush.msra.mxu0 %v47
    %73 = vmatpush.msra.mxu0 %v46
    %74 = vmatmul.f32.gmra.mxu0 %v56
    %v75 = vpop.f32.mrf.mxu0
    %v76 = vadd.f32 %v52, %v75
    %77 = vdwg.mxu0
    %v78 = vtanh.pop %v76
    %79 = vst [vmem:[#allocation7] sm:$0xff] %v78
    // Predicated region
    $region22: #{tpu_custom_call.1} parent=1 // pred_check
      _
    $region23: #{tpu_custom_call.1} parent=1 // pred_check_branch
      %81 = sbr.rel (0) target = $region25
    $region24: #{tpu_custom_call.1} parent=1 // pred_region
      %83 = vsyncadd [#allocation4], 0
      %s85 = sshll.u32 [#allocation7], 4
      %s86 = int_to_ptr.vmem [resolvable:$true] %s85
      %s87 = sshll.u32 %s3, 4
      %s88 = int_to_ptr.hbm [resolvable:$true] %s87
      %90 = dma.vmem_to_hbm [thread:$0]  %s86, 128, %s88, [#allocation4]
    $region25: #{tpu_custom_call.1} parent=1 // pred_fallthru
      _
    // Predicated region
    $region26: #{tpu_custom_call.1} parent=1 // pred_check
      _
    $region27: #{tpu_custom_call.1} parent=1 // pred_check_branch
      %92 = sbr.rel (0) target = $region29
    $region28: #{tpu_custom_call.1} parent=1 // pred_region
      %94 = dma.done [#allocation4], 128
    $region29: #{tpu_custom_call.1} parent=1 // pred_fallthru
      _
    %95 = vsyncpa [#allocation3], 1
    %96 = vsyncpa [#allocation6], 1
    %97 = vsyncpa [#allocation4], 1

</llo_original>
